<compile_context>
chip_gen: v6e
topology: v6e:2x2x1
jax: 0.10.0
libtpu: 0.0.40
codegen_flags: <defaults>
</compile_context>

<pallas_src>
import functools

import jax
import jax.numpy as jnp
from jax.experimental import pallas as pl
from jax.experimental.pallas import tpu as pltpu

HID1, HID2, HID3 = 512, 256, 128


def _round_up(x, m):
    return ((x + m - 1) // m) * m


def actor_kernel(x_ref,
                 w1_ref, b1_ref,
                 w2_ref, b2_ref,
                 w3_ref, b3_ref,
                 w4_ref, b4_ref,
                 o_ref, *, n_sub):
    """Fused 4-layer MLP on one (bb, in_dim) batch tile.

    The tile is processed as `n_sub` independent row sub-blocks inside one
    basic block; the LLO scheduler interleaves their MXU / VPU / EUP work.
    """
    bb = x_ref.shape[0]
    rows = bb // n_sub

    for s in range(n_sub):                       # static unroll -> one BB
        sl = slice(s * rows, (s + 1) * rows)     # sublane-aligned (rows % 8 == 0)

        # bf16 MXU operands, f32 accumulation; elementwise math kept in f32.
        x = x_ref[sl, :].astype(jnp.bfloat16)

        h = jnp.dot(x, w1_ref[...], preferred_element_type=jnp.float32) + b1_ref[...]
        h = jnp.maximum(h, 0.0).astype(jnp.bfloat16)          # ReLU (VPU)

        h = jnp.dot(h, w2_ref[...], preferred_element_type=jnp.float32) + b2_ref[...]
        h = jnp.maximum(h, 0.0).astype(jnp.bfloat16)

        h = jnp.dot(h, w3_ref[...], preferred_element_type=jnp.float32) + b3_ref[...]
        h = jnp.maximum(h, 0.0).astype(jnp.bfloat16)

        h = jnp.dot(h, w4_ref[...], preferred_element_type=jnp.float32) + b4_ref[...]
        o_ref[sl, :] = jnp.tanh(h).astype(o_ref.dtype)        # Tanh (EUP)


@functools.partial(jax.jit, static_argnames=("block_b",))
def actor_forward(state, params, block_b=512):
    """state: (B, input_size) float32 -> (B, output_size) float32.

    block_b: batch tile (rows per grid step).  512 is a good default on
    v5e/v6e; on v7x pick a value giving >= 2 grid steps per TensorCore for
    large B (dimension_semantics=("parallel",) shards the grid across TCs).
    """
    B, in_dim = state.shape
    w1, b1, w2, b2, w3, b3, w4, b4 = params
    out_dim = w4.shape[1]

    # Batch tile: big (MXU-dense, amortizes per-step overhead) but clamped so
    # tiny batches aren't over-padded.  16-row minimum => full bf16 sublane
    # packing and rows%16==0, so 2-way sub-block split stays 8-aligned.
    bb = min(_round_up(block_b, 16), _round_up(B, 16))
    grid = (pl.cdiv(B, bb),)

    # 2 independent row sub-blocks inside the body when the tile is big enough
    # (hides ReLU/cast on the VPU and tanh on the EUP under MXU work).
    n_sub = 2 if bb >= 32 else 1

    # Full-array blocks (constant index_map) for weights / biases.
    full = lambda shape: pl.BlockSpec(shape, lambda i: (0, 0))

    weight_args = (w1, b1, w2, b2, w3, b3, w4, b4)
    flops = 2 * B * (in_dim * HID1 + HID1 * HID2 + HID2 * HID3 + HID3 * out_dim)
    bytes_accessed = (state.size * state.dtype.itemsize
                      + sum(int(p.size) * p.dtype.itemsize for p in weight_args)
                      + B * out_dim * 4)

    out = pl.pallas_call(
        functools.partial(actor_kernel, n_sub=n_sub),
        out_shape=jax.ShapeDtypeStruct((B, out_dim), jnp.float32),
        grid_spec=pltpu.PrefetchScalarGridSpec(
            num_scalar_prefetch=0,
            grid=grid,
            in_specs=[
                pl.BlockSpec((bb, in_dim), lambda i: (i, 0)),
                full(w1.shape), full(b1.shape),
                full(w2.shape), full(b2.shape),
                full(w3.shape), full(b3.shape),
                full(w4.shape), full(b4.shape),
            ],
            # Unpadded output: block width == full array width (legal), so no
            # 128-lane padding and no trailing slice kernel.
            out_specs=pl.BlockSpec((bb, out_dim), lambda i: (i, 0)),
        ),
        compiler_params=pltpu.CompilerParams(
            dimension_semantics=("parallel",)),
        cost_estimate=pl.CostEstimate(
            flops=flops,
            transcendentals=B * out_dim,
            bytes_accessed=bytes_accessed),
    )(state, *weight_args)

    return out


def init_actor_params(key, input_size, output_size):
    """Init mimicking nn.Linear's uniform(-1/sqrt(in), 1/sqrt(in)).

    Weights are stored transposed to (in, out) and cast to bf16 (MXU operand
    dtype); biases stay f32 with shape (1, out) so they broadcast over batch.
    """
    dims = [(input_size, HID1), (HID1, HID2), (HID2, HID3), (HID3, output_size)]
    params = []
    for fan_in, fan_out in dims:
        key, kw, kb = jax.random.split(key, 3)
        bound = 1.0 / jnp.sqrt(jnp.float32(fan_in))
        w = jax.random.uniform(kw, (fan_in, fan_out), jnp.float32, -bound, bound)
        b = jax.random.uniform(kb, (1, fan_out), jnp.float32, -bound, bound)
        params += [w.astype(jnp.bfloat16), b]
    return tuple(params)


def actor_reference(state, params):
    """Pure-JAX f32 reference (bf16 weights upcast to f32)."""
    w1, b1, w2, b2, w3, b3, w4, b4 = params
    f = lambda w: w.astype(jnp.float32)
    h = jnp.maximum(state @ f(w1) + b1, 0.0)
    h = jnp.maximum(h @ f(w2) + b2, 0.0)
    h = jnp.maximum(h @ f(w3) + b3, 0.0)
    return jnp.tanh(h @ f(w4) + b4)


if __name__ == "__main__":
    key = jax.random.PRNGKey(0)
    k_params, k_state = jax.random.split(key)

    batch, input_size, output_size = 8, 32, 8
    params = init_actor_params(k_params, input_size, output_size)
    state = jax.random.normal(k_state, (batch, input_size), jnp.float32)

    out = actor_forward(state, params)
    out = jax.block_until_ready(out)

    ref = actor_reference(state, params)
    assert out.shape == (batch, output_size)
    # bf16 MXU operands (incl. bf16-cast input) with f32 accumulation ->
    # loose tolerance vs the f32 reference.
    assert jnp.allclose(out, ref, atol=5e-2, rtol=5e-2), "mismatch vs reference"

    print("KERNEL_OK")
</pallas_src>

<mosaic_0001>
module attributes {stable_mosaic.version = 11 : i64} {
  func.func @actor_kernel(%arg0: i32, %arg1: memref<16x32xf32, #tpu.memory_space<vmem>>, %arg2: memref<32x512xbf16, #tpu.memory_space<vmem>>, %arg3: memref<1x512xf32, #tpu.memory_space<vmem>>, %arg4: memref<512x256xbf16, #tpu.memory_space<vmem>>, %arg5: memref<1x256xf32, #tpu.memory_space<vmem>>, %arg6: memref<256x128xbf16, #tpu.memory_space<vmem>>, %arg7: memref<1x128xf32, #tpu.memory_space<vmem>>, %arg8: memref<128x8xbf16, #tpu.memory_space<vmem>>, %arg9: memref<1x8xf32, #tpu.memory_space<vmem>>, %arg10: memref<16x8xf32, #tpu.memory_space<vmem>>) attributes {dimension_semantics = [#tpu.dimension_semantics<parallel>], iteration_bounds = array<i64: 1>, scalar_prefetch = 0 : i64, scratch_operands = 0 : i64, tpu.core_type = #tpu.core_type<tc>, window_params = [{transform_indices = @transform_0, window_bounds = array<i64: 16, 32>}, {pipeline_mode = #tpu.pipeline_mode<synchronous>, transform_indices = @transform_1, window_bounds = array<i64: 32, 512>}, {pipeline_mode = #tpu.pipeline_mode<synchronous>, transform_indices = @transform_2, window_bounds = array<i64: 1, 512>}, {pipeline_mode = #tpu.pipeline_mode<synchronous>, transform_indices = @transform_3, window_bounds = array<i64: 512, 256>}, {pipeline_mode = #tpu.pipeline_mode<synchronous>, transform_indices = @transform_4, window_bounds = array<i64: 1, 256>}, {pipeline_mode = #tpu.pipeline_mode<synchronous>, transform_indices = @transform_5, window_bounds = array<i64: 256, 128>}, {pipeline_mode = #tpu.pipeline_mode<synchronous>, transform_indices = @transform_6, window_bounds = array<i64: 1, 128>}, {pipeline_mode = #tpu.pipeline_mode<synchronous>, transform_indices = @transform_7, window_bounds = array<i64: 128, 8>}, {pipeline_mode = #tpu.pipeline_mode<synchronous>, transform_indices = @transform_8, window_bounds = array<i64: 1, 8>}, {transform_indices = @transform_9, window_bounds = array<i64: 16, 8>}]} {
    %c0 = arith.constant 0 : index
    %c0_0 = arith.constant 0 : index
    %0 = vector.load %arg1[%c0, %c0_0] : memref<16x32xf32, #tpu.memory_space<vmem>>, vector<16x32xf32>
    %1 = arith.truncf %0 : vector<16x32xf32> to vector<16x32xbf16>
    %c0_1 = arith.constant 0 : index
    %c0_2 = arith.constant 0 : index
    %2 = vector.load %arg2[%c0_1, %c0_2] : memref<32x512xbf16, #tpu.memory_space<vmem>>, vector<32x512xbf16>
    %cst = arith.constant dense<0.000000e+00> : vector<16x512xf32>
    %3 = tpu.matmul %1, %2, %cst {dimension_numbers = #tpu.dot_dimension_numbers<[1], [0], [0], [1], [0, 0, 1, 1], [], []>} : vector<16x32xbf16>, vector<32x512xbf16>, vector<16x512xf32> -> vector<16x512xf32>
    %c0_3 = arith.constant 0 : index
    %c0_4 = arith.constant 0 : index
    %4 = vector.load %arg3[%c0_3, %c0_4] : memref<1x512xf32, #tpu.memory_space<vmem>>, vector<1x512xf32>
    %5 = vector.broadcast %4 : vector<1x512xf32> to vector<16x512xf32>
    %6 = arith.addf %3, %5 : vector<16x512xf32>
    %cst_5 = arith.constant 0.000000e+00 : f32
    %7 = vector.broadcast %cst_5 : f32 to vector<16x512xf32>
    %8 = arith.maximumf %6, %7 : vector<16x512xf32>
    %9 = arith.truncf %8 : vector<16x512xf32> to vector<16x512xbf16>
    %c0_6 = arith.constant 0 : index
    %c0_7 = arith.constant 0 : index
    %10 = vector.load %arg4[%c0_6, %c0_7] : memref<512x256xbf16, #tpu.memory_space<vmem>>, vector<512x256xbf16>
    %cst_8 = arith.constant dense<0.000000e+00> : vector<16x256xf32>
    %11 = tpu.matmul %9, %10, %cst_8 {dimension_numbers = #tpu.dot_dimension_numbers<[1], [0], [0], [1], [0, 0, 1, 1], [], []>} : vector<16x512xbf16>, vector<512x256xbf16>, vector<16x256xf32> -> vector<16x256xf32>
    %c0_9 = arith.constant 0 : index
    %c0_10 = arith.constant 0 : index
    %12 = vector.load %arg5[%c0_9, %c0_10] : memref<1x256xf32, #tpu.memory_space<vmem>>, vector<1x256xf32>
    %13 = vector.broadcast %12 : vector<1x256xf32> to vector<16x256xf32>
    %14 = arith.addf %11, %13 : vector<16x256xf32>
    %cst_11 = arith.constant 0.000000e+00 : f32
    %15 = vector.broadcast %cst_11 : f32 to vector<16x256xf32>
    %16 = arith.maximumf %14, %15 : vector<16x256xf32>
    %17 = arith.truncf %16 : vector<16x256xf32> to vector<16x256xbf16>
    %c0_12 = arith.constant 0 : index
    %c0_13 = arith.constant 0 : index
    %18 = vector.load %arg6[%c0_12, %c0_13] : memref<256x128xbf16, #tpu.memory_space<vmem>>, vector<256x128xbf16>
    %cst_14 = arith.constant dense<0.000000e+00> : vector<16x128xf32>
    %19 = tpu.matmul %17, %18, %cst_14 {dimension_numbers = #tpu.dot_dimension_numbers<[1], [0], [0], [1], [0, 0, 1, 1], [], []>} : vector<16x256xbf16>, vector<256x128xbf16>, vector<16x128xf32> -> vector<16x128xf32>
    %c0_15 = arith.constant 0 : index
    %c0_16 = arith.constant 0 : index
    %20 = vector.load %arg7[%c0_15, %c0_16] : memref<1x128xf32, #tpu.memory_space<vmem>>, vector<1x128xf32>
    %21 = vector.broadcast %20 : vector<1x128xf32> to vector<16x128xf32>
    %22 = arith.addf %19, %21 : vector<16x128xf32>
    %cst_17 = arith.constant 0.000000e+00 : f32
    %23 = vector.broadcast %cst_17 : f32 to vector<16x128xf32>
    %24 = arith.maximumf %22, %23 : vector<16x128xf32>
    %25 = arith.truncf %24 : vector<16x128xf32> to vector<16x128xbf16>
    %c0_18 = arith.constant 0 : index
    %c0_19 = arith.constant 0 : index
    %26 = vector.load %arg8[%c0_18, %c0_19] : memref<128x8xbf16, #tpu.memory_space<vmem>>, vector<128x8xbf16>
    %cst_20 = arith.constant dense<0.000000e+00> : vector<16x8xf32>
    %27 = tpu.matmul %25, %26, %cst_20 {dimension_numbers = #tpu.dot_dimension_numbers<[1], [0], [0], [1], [0, 0, 1, 1], [], []>} : vector<16x128xbf16>, vector<128x8xbf16>, vector<16x8xf32> -> vector<16x8xf32>
    %c0_21 = arith.constant 0 : index
    %c0_22 = arith.constant 0 : index
    %28 = vector.load %arg9[%c0_21, %c0_22] : memref<1x8xf32, #tpu.memory_space<vmem>>, vector<1x8xf32>
    %29 = vector.broadcast %28 : vector<1x8xf32> to vector<16x8xf32>
    %30 = arith.addf %27, %29 : vector<16x8xf32>
    %31 = math.tanh %30 : vector<16x8xf32>
    %c0_23 = arith.constant 0 : index
    %c0_24 = arith.constant 0 : index
    %32 = vector.load %arg10[%c0_23, %c0_24] : memref<16x8xf32, #tpu.memory_space<vmem>>, vector<16x8xf32>
    tpu.vector_store %arg10[%c0_23, %c0_24], %31 {strides = array<i32>} : memref<16x8xf32, #tpu.memory_space<vmem>>, vector<16x8xf32>,
    return
  }
  func.func @transform_0(%arg0: i32) -> (i32, i32) {
    %c0_i32 = arith.constant 0 : i32
    %c0_i32_0 = arith.constant 0 : i32
    return %arg0, %c0_i32 : i32, i32
  }
  func.func @transform_1(%arg0: i32) -> (i32, i32) {
    %c0_i32 = arith.constant 0 : i32
    %c0_i32_0 = arith.constant 0 : i32
    %c0_i32_1 = arith.constant 0 : i32
    return %c0_i32, %c0_i32_0 : i32, i32
  }
  func.func @transform_2(%arg0: i32) -> (i32, i32) {
    %c0_i32 = arith.constant 0 : i32
    %c0_i32_0 = arith.constant 0 : i32
    %c0_i32_1 = arith.constant 0 : i32
    return %c0_i32, %c0_i32_0 : i32, i32
  }
  func.func @transform_3(%arg0: i32) -> (i32, i32) {
    %c0_i32 = arith.constant 0 : i32
    %c0_i32_0 = arith.constant 0 : i32
    %c0_i32_1 = arith.constant 0 : i32
    return %c0_i32, %c0_i32_0 : i32, i32
  }
  func.func @transform_4(%arg0: i32) -> (i32, i32) {
    %c0_i32 = arith.constant 0 : i32
    %c0_i32_0 = arith.constant 0 : i32
    %c0_i32_1 = arith.constant 0 : i32
    return %c0_i32, %c0_i32_0 : i32, i32
  }
  func.func @transform_5(%arg0: i32) -> (i32, i32) {
    %c0_i32 = arith.constant 0 : i32
    %c0_i32_0 = arith.constant 0 : i32
    %c0_i32_1 = arith.constant 0 : i32
    return %c0_i32, %c0_i32_0 : i32, i32
  }
  func.func @transform_6(%arg0: i32) -> (i32, i32) {
    %c0_i32 = arith.constant 0 : i32
    %c0_i32_0 = arith.constant 0 : i32
    %c0_i32_1 = arith.constant 0 : i32
    return %c0_i32, %c0_i32_0 : i32, i32
  }
  func.func @transform_7(%arg0: i32) -> (i32, i32) {
    %c0_i32 = arith.constant 0 : i32
    %c0_i32_0 = arith.constant 0 : i32
    %c0_i32_1 = arith.constant 0 : i32
    return %c0_i32, %c0_i32_0 : i32, i32
  }
  func.func @transform_8(%arg0: i32) -> (i32, i32) {
    %c0_i32 = arith.constant 0 : i32
    %c0_i32_0 = arith.constant 0 : i32
    %c0_i32_1 = arith.constant 0 : i32
    return %c0_i32, %c0_i32_0 : i32, i32
  }
  func.func @transform_9(%arg0: i32) -> (i32, i32) {
    %c0_i32 = arith.constant 0 : i32
    %c0_i32_0 = arith.constant 0 : i32
    return %arg0, %c0_i32 : i32, i32
  }
}

</mosaic_0001>

<llo_original>
// kernel: actor_forward.1
$region0: #{actor_forward.1}
  #allocation0 [shape = 'u32[]', space=smem, size = 0x4, offset = 0x4, fixed_abs, tag = 'smem constant byte address 0x4 - core index']
  #allocation1 [shape = 'u32[144,128]{1,0:T(1,128)}', space=vmem, size = 0x12000, scoped, tag = 'internal scratch']
  %s0 = inlined_call_operand.hbm [shape: f32[8,32], index: 0, kind: input, shape index: {}]
  %s1 = inlined_call_operand.vmem [shape: bf16[32,512], index: 1, kind: input, shape index: {}]
  %s2 = inlined_call_operand.vmem [shape: f32[1,512], index: 2, kind: input, shape index: {}]
  %s3 = inlined_call_operand.hbm [shape: bf16[512,256], index: 3, kind: input, shape index: {}]
  %s4 = inlined_call_operand.vmem [shape: f32[1,256], index: 4, kind: input, shape index: {}]
  %s5 = inlined_call_operand.hbm [shape: bf16[256,128], index: 5, kind: input, shape index: {}]
  %s6 = inlined_call_operand.vmem [shape: f32[1,128], index: 6, kind: input, shape index: {}]
  %s7 = inlined_call_operand.vmem [shape: bf16[128,8], index: 7, kind: input, shape index: {}]
  %s8 = inlined_call_operand.vmem [shape: f32[1,8], index: 8, kind: input, shape index: {}]
  %s9 = inlined_call_operand.hbm [shape: f32[8,8], index: 9, kind: output, shape index: {}]
  %s10 = sld [smem:[#allocation0]]
  $region58: #{actor_forward.1} parent=0
    _
  %s12 = ssub.s32 1, %s10
  %s13 = scalar_select 0, %s12, %s10
  $region1: #{actor_forward.1} parent=0
    #allocation2 [shape = 'u8[8192]{0}', space=vmem, size = 0x2000, scoped, tag = 'input window, operand 0, single buffered']
    #allocation3 [shape = 's32[1]{0}', space=sflag, size = 0x4, scoped, tag = 'scoped memory for actor_forward.1']
    #allocation4 [shape = 's32[1]{0}', space=sflag, size = 0x4, scoped, tag = 'scoped memory for actor_forward.1']
    #allocation5 [shape = 'u8[262144]{0}', space=vmem, size = 0x40000, scoped, tag = 'input window, operand 3, single buffered']
    #allocation6 [shape = 's32[1]{0}', space=sflag, size = 0x4, scoped, tag = 'scoped memory for actor_forward.1']
    #allocation7 [shape = 'u8[65536]{0}', space=vmem, size = 0x10000, scoped, tag = 'input window, operand 5, single buffered']
    #allocation8 [shape = 'u8[8192]{0}', space=vmem, size = 0x2000, scoped, tag = 'output window, operand 0, single buffered']
    %14 = vsyncpa [#allocation3], 0
    %15 = vsyncpa [#allocation6], 0
    %16 = vsyncpa [#allocation4], 0
    // Predicated region
    $region2: #{actor_forward.1} parent=1 // pred_check
      _
    $region3: #{actor_forward.1} parent=1 // pred_check_branch
      %18 = sbr.rel (0) target = $region5
    $region4: #{actor_forward.1} parent=1 // pred_region
      %s20 = ssub.s32 256, 128
      %21 = vsyncadd [#allocation3], %s20
      %s22 = sshll.u32 [#allocation2], 4
      %s23 = int_to_ptr.vmem [resolvable:$true] %s22
      %28 = dma.hbm_to_vmem [thread:$0]  %s0, 128, %s23, [#allocation3], 128, 128, 8
    $region5: #{actor_forward.1} parent=1 // pred_fallthru
      _
    // Predicated region
    $region6: #{actor_forward.1} parent=1 // pred_check
      _
    $region7: #{actor_forward.1} parent=1 // pred_check_branch
      %30 = sbr.rel (0) target = $region9
    $region8: #{actor_forward.1} parent=1 // pred_region
      _
    $region9: #{actor_forward.1} parent=1 // pred_fallthru
      _
    // Predicated region
    $region10: #{actor_forward.1} parent=1 // pred_check
      _
    $region11: #{actor_forward.1} parent=1 // pred_check_branch
      %32 = sbr.rel (0) target = $region13
    $region12: #{actor_forward.1} parent=1 // pred_region
      _
    $region13: #{actor_forward.1} parent=1 // pred_fallthru
      _
    // Predicated region
    $region14: #{actor_forward.1} parent=1 // pred_check
      _
    $region15: #{actor_forward.1} parent=1 // pred_check_branch
      %34 = sbr.rel (0) target = $region17
    $region16: #{actor_forward.1} parent=1 // pred_region
      %s36 = ssub.s32 8192, 8192
      %37 = vsyncadd [#allocation6], %s36
      %s38 = sshll.u32 [#allocation5], 4
      %s39 = int_to_ptr.vmem [resolvable:$true] %s38
      %44 = dma.hbm_to_vmem [thread:$0]  %s3, 8192, %s39, [#allocation6], 128, 128, 8
    $region17: #{actor_forward.1} parent=1 // pred_fallthru
      _
    // Predicated region
    $region18: #{actor_forward.1} parent=1 // pred_check
      _
    $region19: #{actor_forward.1} parent=1 // pred_check_branch
      %46 = sbr.rel (0) target = $region21
    $region20: #{actor_forward.1} parent=1 // pred_region
      _
    $region21: #{actor_forward.1} parent=1 // pred_fallthru
      _
    // Predicated region
    $region22: #{actor_forward.1} parent=1 // pred_check
      _
    $region23: #{actor_forward.1} parent=1 // pred_check_branch
      %48 = sbr.rel (0) target = $region25
    $region24: #{actor_forward.1} parent=1 // pred_region
      %s50 = ssub.s32 2048, 2048
      %51 = vsyncadd [#allocation6], %s50
      %s52 = sshll.u32 [#allocation7], 4
      %s53 = int_to_ptr.vmem [resolvable:$true] %s52
      %58 = dma.hbm_to_vmem [thread:$0]  %s5, 2048, %s53, [#allocation6], 64, 64, 4
    $region25: #{actor_forward.1} parent=1 // pred_fallthru
      _
    // Predicated region
    $region26: #{actor_forward.1} parent=1 // pred_check
      _
    $region27: #{actor_forward.1} parent=1 // pred_check_branch
      %60 = sbr.rel (0) target = $region29
    $region28: #{actor_forward.1} parent=1 // pred_region
      _
    $region29: #{actor_forward.1} parent=1 // pred_fallthru
      _
    // Predicated region
    $region30: #{actor_forward.1} parent=1 // pred_check
      _
    $region31: #{actor_forward.1} parent=1 // pred_check_branch
      %62 = sbr.rel (0) target = $region33
    $region32: #{actor_forward.1} parent=1 // pred_region
      _
    $region33: #{actor_forward.1} parent=1 // pred_fallthru
      _
    // Predicated region
    $region34: #{actor_forward.1} parent=1 // pred_check
      _
    $region35: #{actor_forward.1} parent=1 // pred_check_branch
      %64 = sbr.rel (0) target = $region37
    $region36: #{actor_forward.1} parent=1 // pred_region
      _
    $region37: #{actor_forward.1} parent=1 // pred_fallthru
      _
    // Predicated region
    $region38: #{actor_forward.1} parent=1 // pred_check
      _
    $region39: #{actor_forward.1} parent=1 // pred_check_branch
      %66 = sbr.rel (0) target = $region41
    $region40: #{actor_forward.1} parent=1 // pred_region
      %67 = dma.done [#allocation3], 256
    $region41: #{actor_forward.1} parent=1 // pred_fallthru
      _
    // Predicated region
    $region42: #{actor_forward.1} parent=1 // pred_check
      _
    $region43: #{actor_forward.1} parent=1 // pred_check_branch
      %69 = sbr.rel (0) target = $region45
    $region44: #{actor_forward.1} parent=1 // pred_region
      %70 = dma.done [#allocation6], 8192
    $region45: #{actor_forward.1} parent=1 // pred_fallthru
      _
    // Predicated region
    $region46: #{actor_forward.1} parent=1 // pred_check
      _
    $region47: #{actor_forward.1} parent=1 // pred_check_branch
      %72 = sbr.rel (0) target = $region49
    $region48: #{actor_forward.1} parent=1 // pred_region
      %73 = dma.done [#allocation6], 2048
    $region49: #{actor_forward.1} parent=1 // pred_fallthru
      _
    %v75 = vld [vmem:[#allocation2] sm:$0xff]
    %v76 = vld [vmem:[#allocation2 + $0x8] sm:$0xff]
    %v77 = vpack.c.bf16 %v76, %v75
    %v78 = vld [vmem:[%s1] sm:$0xff]
    %v79 = vld [vmem:[%s1 + $0x8] sm:$0xff]
    %v80 = vld [vmem:[%s1 + $0x10] sm:$0xff]
    %v81 = vld [vmem:[%s1 + $0x18] sm:$0xff]
    %v82 = vld [vmem:[%s1 + $0x20] sm:$0xff]
    %v83 = vld [vmem:[%s1 + $0x28] sm:$0xff]
    %v84 = vld [vmem:[%s1 + $0x30] sm:$0xff]
    %v85 = vld [vmem:[%s1 + $0x38] sm:$0xff]
    %v86 = vld [vmem:[%s2] sm:$0xf]
    %v88 = vlaneseq
    %v89 = vshrl.u32 %v88, 7
    %v90 = vsub.s32 0, %v89
    %v91 = vrot.slane %v86, %v90
    %v92 = vlaneseq
    %v93 = vshrl.u32 %v92, 7
    %v94 = vsub.s32 1, %v93
    %v95 = vrot.slane %v86, %v94
    %v96 = vlaneseq
    %v97 = vshrl.u32 %v96, 7
    %v98 = vsub.s32 2, %v97
    %v99 = vrot.slane %v86, %v98
    %v100 = vlaneseq
    %v101 = vshrl.u32 %v100, 7
    %v102 = vsub.s32 3, %v101
    %v103 = vrot.slane %v86, %v102
    %v116 = vunpack.c.l.b16 %v78
    %v117 = vunpack.c.h.b16 %v78
    %v118 = vunpack.c.l.b16 %v79
    %v119 = vunpack.c.h.b16 %v79
    %v120 = vunpack.c.l.b16 %v80
    %v121 = vunpack.c.h.b16 %v80
    %v122 = vunpack.c.l.b16 %v81
    %v123 = vunpack.c.h.b16 %v81
    %v124 = vunpack.c.l.b16 %v82
    %v125 = vunpack.c.h.b16 %v82
    %v126 = vunpack.c.l.b16 %v83
    %v127 = vunpack.c.h.b16 %v83
    %v128 = vunpack.c.l.b16 %v84
    %v129 = vunpack.c.h.b16 %v84
    %v130 = vunpack.c.l.b16 %v85
    %v131 = vunpack.c.h.b16 %v85
    %v132 = vpack.c.b16 %v120, %v116
    %v133 = vpack.c.b16 %v121, %v117
    %v134 = vpack.c.b16 %v122, %v118
    %v135 = vpack.c.b16 %v123, %v119
    %v136 = vpack.c.b16 %v128, %v124
    %v137 = vpack.c.b16 %v129, %v125
    %v138 = vpack.c.b16 %v130, %v126
    %v139 = vpack.c.b16 %v131, %v127
    %vm148 = vcmask 261120
    %v150 = vsel %vm148, %v77, 0
    %152 = vmatprep.subr.bf16.mxu0 0
    %153 = vmatpush1.bf16.msra.mxu0 0
    %154 = vmatprep.subr.bf16.mxu0 0
    %155 = vmatpush1.bf16.msra.mxu0 0
    %156 = vmatprep.subr.bf16.mxu0 0
    %157 = vmatpush1.bf16.msra.mxu0 0
    %158 = vmatprep.subr.bf16.mxu0 0
    %159 = vmatpush1.bf16.msra.mxu0 0
    %160 = vmatprep.subr.bf16.mxu0 0
    %161 = vmatpush1.bf16.msra.mxu0 0
    %162 = vmatprep.subr.bf16.mxu0 0
    %163 = vmatpush1.bf16.msra.mxu0 0
    %164 = vmatprep.subr.bf16.mxu0 %v137
    %165 = vmatpush1.bf16.msra.mxu0 %v136
    %166 = vmatprep.subr.bf16.mxu0 %v133
    %167 = vmatpush1.bf16.msra.mxu0 %v132
    %168 = vmatprep.subr.bf16.mxu0 0
    %169 = vmatpush2.bf16.msra.mxu0 0
    %170 = vmatprep.subr.bf16.mxu0 0
    %171 = vmatpush2.bf16.msra.mxu0 0
    %172 = vmatprep.subr.bf16.mxu0 0
    %173 = vmatpush2.bf16.msra.mxu0 0
    %174 = vmatprep.subr.bf16.mxu0 0
    %175 = vmatpush2.bf16.msra.mxu0 0
    %176 = vmatprep.subr.bf16.mxu0 0
    %177 = vmatpush2.bf16.msra.mxu0 0
    %178 = vmatprep.subr.bf16.mxu0 0
    %179 = vmatpush2.bf16.msra.mxu0 0
    %180 = vmatprep.subr.bf16.mxu0 0
    %181 = vmatpush2.bf16.msra.mxu0 0
    %182 = vmatprep.subr.bf16.mxu0 0
    %183 = vmatpush2.bf16.msra.mxu0 0
    %184 = vmatprep.mubr.bf16.mxu0 0
    %185 = vmatmul.mubr.bf16.gmra.mxu0 %v150
    %v186 = vpop.f32.mrf.mxu0
    %v187 = vadd.f32 %v91, %v186
    %v188 = vpop.f32.mrf.mxu0
    %v189 = vadd.f32 %v95, %v188
    %v190 = vpop.f32.mrf.mxu0
    %v191 = vadd.f32 %v91, %v190
    %v192 = vpop.f32.mrf.mxu0
    %v193 = vadd.f32 %v95, %v192
    %194 = vdwg.mxu0
    %195 = vmatprep.subr.bf16.mxu0 0
    %196 = vmatpush1.bf16.msra.mxu0 0
    %197 = vmatprep.subr.bf16.mxu0 0
    %198 = vmatpush1.bf16.msra.mxu0 0
    %199 = vmatprep.subr.bf16.mxu0 0
    %200 = vmatpush1.bf16.msra.mxu0 0
    %201 = vmatprep.subr.bf16.mxu0 0
    %202 = vmatpush1.bf16.msra.mxu0 0
    %203 = vmatprep.subr.bf16.mxu0 0
    %204 = vmatpush1.bf16.msra.mxu0 0
    %205 = vmatprep.subr.bf16.mxu0 0
    %206 = vmatpush1.bf16.msra.mxu0 0
    %207 = vmatprep.subr.bf16.mxu0 %v139
    %208 = vmatpush1.bf16.msra.mxu0 %v138
    %209 = vmatprep.subr.bf16.mxu0 %v135
    %210 = vmatpush1.bf16.msra.mxu0 %v134
    %211 = vmatprep.subr.bf16.mxu0 0
    %212 = vmatpush2.bf16.msra.mxu0 0
    %213 = vmatprep.subr.bf16.mxu0 0
    %214 = vmatpush2.bf16.msra.mxu0 0
    %215 = vmatprep.subr.bf16.mxu0 0
    %216 = vmatpush2.bf16.msra.mxu0 0
    %217 = vmatprep.subr.bf16.mxu0 0
    %218 = vmatpush2.bf16.msra.mxu0 0
    %219 = vmatprep.subr.bf16.mxu0 0
    %220 = vmatpush2.bf16.msra.mxu0 0
    %221 = vmatprep.subr.bf16.mxu0 0
    %222 = vmatpush2.bf16.msra.mxu0 0
    %223 = vmatprep.subr.bf16.mxu0 0
    %224 = vmatpush2.bf16.msra.mxu0 0
    %225 = vmatprep.subr.bf16.mxu0 0
    %226 = vmatpush2.bf16.msra.mxu0 0
    %227 = vmatprep.mubr.bf16.mxu0 0
    %228 = vmatmul.mubr.bf16.gmra.mxu0 %v150
    %v229 = vpop.f32.mrf.mxu0
    %v230 = vadd.f32 %v99, %v229
    %v231 = vpop.f32.mrf.mxu0
    %v232 = vadd.f32 %v103, %v231
    %v233 = vpop.f32.mrf.mxu0
    %v234 = vadd.f32 %v99, %v233
    %v235 = vpop.f32.mrf.mxu0
    %v236 = vadd.f32 %v103, %v235
    %237 = vdwg.mxu0
    %v238 = vmax.f32 %v187, 0.0
    %v239 = vmax.f32 %v189, 0.0
    %v240 = vmax.f32 %v230, 0.0
    %v241 = vmax.f32 %v232, 0.0
    %v242 = vmax.f32 %v191, 0.0
    %v243 = vmax.f32 %v193, 0.0
    %v244 = vmax.f32 %v234, 0.0
    %v245 = vmax.f32 %v236, 0.0
    %v246 = vpack.c.bf16 %v242, %v238
    %v247 = vpack.c.bf16 %v243, %v239
    %v248 = vpack.c.bf16 %v244, %v240
    %v249 = vpack.c.bf16 %v245, %v241
    %v250 = vld [vmem:[#allocation5] sm:$0xff]
    %v251 = vld [vmem:[#allocation5 + $0x8] sm:$0xff]
    %v252 = vld [vmem:[#allocation5 + $0x10] sm:$0xff]
    %v253 = vld [vmem:[#allocation5 + $0x18] sm:$0xff]
    %v254 = vld [vmem:[#allocation5 + $0x20] sm:$0xff]
    %v255 = vld [vmem:[#allocation5 + $0x28] sm:$0xff]
    %v256 = vld [vmem:[#allocation5 + $0x30] sm:$0xff]
    %v257 = vld [vmem:[#allocation5 + $0x38] sm:$0xff]
    %v258 = vld [vmem:[#allocation5 + $0x40] sm:$0xff]
    %v259 = vld [vmem:[#allocation5 + $0x48] sm:$0xff]
    %v260 = vld [vmem:[#allocation5 + $0x50] sm:$0xff]
    %v261 = vld [vmem:[#allocation5 + $0x58] sm:$0xff]
    %v262 = vld [vmem:[#allocation5 + $0x60] sm:$0xff]
    %v263 = vld [vmem:[#allocation5 + $0x68] sm:$0xff]
    %v264 = vld [vmem:[#allocation5 + $0x70] sm:$0xff]
    %v265 = vld [vmem:[#allocation5 + $0x78] sm:$0xff]
    %v266 = vld [vmem:[#allocation5 + $0x80] sm:$0xff]
    %v267 = vld [vmem:[#allocation5 + $0x88] sm:$0xff]
    %v268 = vld [vmem:[#allocation5 + $0x90] sm:$0xff]
    %v269 = vld [vmem:[#allocation5 + $0x98] sm:$0xff]
    %v270 = vld [vmem:[#allocation5 + $0xa0] sm:$0xff]
    %v271 = vld [vmem:[#allocation5 + $0xa8] sm:$0xff]
    %v272 = vld [vmem:[#allocation5 + $0xb0] sm:$0xff]
    %v273 = vld [vmem:[#allocation5 + $0xb8] sm:$0xff]
    %v274 = vld [vmem:[#allocation5 + $0xc0] sm:$0xff]
    %v275 = vld [vmem:[#allocation5 + $0xc8] sm:$0xff]
    %v276 = vld [vmem:[#allocation5 + $0xd0] sm:$0xff]
    %v277 = vld [vmem:[#allocation5 + $0xd8] sm:$0xff]
    %v278 = vld [vmem:[#allocation5 + $0xe0] sm:$0xff]
    %v279 = vld [vmem:[#allocation5 + $0xe8] sm:$0xff]
    %v280 = vld [vmem:[#allocation5 + $0xf0] sm:$0xff]
    %v281 = vld [vmem:[#allocation5 + $0xf8] sm:$0xff]
    %v282 = vld [vmem:[#allocation5 + $0x100] sm:$0xff]
    %v283 = vld [vmem:[#allocation5 + $0x108] sm:$0xff]
    %v284 = vld [vmem:[#allocation5 + $0x110] sm:$0xff]
    %v285 = vld [vmem:[#allocation5 + $0x118] sm:$0xff]
    %v286 = vld [vmem:[#allocation5 + $0x120] sm:$0xff]
    %v287 = vld [vmem:[#allocation5 + $0x128] sm:$0xff]
    %v288 = vld [vmem:[#allocation5 + $0x130] sm:$0xff]
    %v289 = vld [vmem:[#allocation5 + $0x138] sm:$0xff]
    %v290 = vld [vmem:[#allocation5 + $0x140] sm:$0xff]
    %v291 = vld [vmem:[#allocation5 + $0x148] sm:$0xff]
    %v292 = vld [vmem:[#allocation5 + $0x150] sm:$0xff]
    %v293 = vld [vmem:[#allocation5 + $0x158] sm:$0xff]
    %v294 = vld [vmem:[#allocation5 + $0x160] sm:$0xff]
    %v295 = vld [vmem:[#allocation5 + $0x168] sm:$0xff]
    %v296 = vld [vmem:[#allocation5 + $0x170] sm:$0xff]
    %v297 = vld [vmem:[#allocation5 + $0x178] sm:$0xff]
    %v298 = vld [vmem:[#allocation5 + $0x180] sm:$0xff]
    %v299 = vld [vmem:[#allocation5 + $0x188] sm:$0xff]
    %v300 = vld [vmem:[#allocation5 + $0x190] sm:$0xff]
    %v301 = vld [vmem:[#allocation5 + $0x198] sm:$0xff]
    %v302 = vld [vmem:[#allocation5 + $0x1a0] sm:$0xff]
    %v303 = vld [vmem:[#allocation5 + $0x1a8] sm:$0xff]
    %v304 = vld [vmem:[#allocation5 + $0x1b0] sm:$0xff]
    %v305 = vld [vmem:[#allocation5 + $0x1b8] sm:$0xff]
    %v306 = vld [vmem:[#allocation5 + $0x1c0] sm:$0xff]
    %v307 = vld [vmem:[#allocation5 + $0x1c8] sm:$0xff]
    %v308 = vld [vmem:[#allocation5 + $0x1d0] sm:$0xff]
    %v309 = vld [vmem:[#allocation5 + $0x1d8] sm:$0xff]
    %v310 = vld [vmem:[#allocation5 + $0x1e0] sm:$0xff]
    %v311 = vld [vmem:[#allocation5 + $0x1e8] sm:$0xff]
    %v312 = vld [vmem:[#allocation5 + $0x1f0] sm:$0xff]
    %v313 = vld [vmem:[#allocation5 + $0x1f8] sm:$0xff]
    %v314 = vld [vmem:[%s4] sm:$0x3]
    %v316 = vlaneseq
    %v317 = vshrl.u32 %v316, 7
    %v318 = vsub.s32 0, %v317
    %v319 = vrot.slane %v314, %v318
    %v320 = vlaneseq
    %v321 = vshrl.u32 %v320, 7
    %v322 = vsub.s32 1, %v321
    %v323 = vrot.slane %v314, %v322
    %v390 = vunpack.c.l.b16 %v250
    %v391 = vunpack.c.h.b16 %v250
    %v392 = vunpack.c.l.b16 %v251
    %v393 = vunpack.c.h.b16 %v251
    %v394 = vunpack.c.l.b16 %v252
    %v395 = vunpack.c.h.b16 %v252
    %v396 = vunpack.c.l.b16 %v253
    %v397 = vunpack.c.h.b16 %v253
    %v398 = vunpack.c.l.b16 %v254
    %v399 = vunpack.c.h.b16 %v254
    %v400 = vunpack.c.l.b16 %v255
    %v401 = vunpack.c.h.b16 %v255
    %v402 = vunpack.c.l.b16 %v256
    %v403 = vunpack.c.h.b16 %v256
    %v404 = vunpack.c.l.b16 %v257
    %v405 = vunpack.c.h.b16 %v257
    %v406 = vunpack.c.l.b16 %v258
    %v407 = vunpack.c.h.b16 %v258
    %v408 = vunpack.c.l.b16 %v259
    %v409 = vunpack.c.h.b16 %v259
    %v410 = vunpack.c.l.b16 %v260
    %v411 = vunpack.c.h.b16 %v260
    %v412 = vunpack.c.l.b16 %v261
    %v413 = vunpack.c.h.b16 %v261
    %v414 = vunpack.c.l.b16 %v262
    %v415 = vunpack.c.h.b16 %v262
    %v416 = vunpack.c.l.b16 %v263
    %v417 = vunpack.c.h.b16 %v263
    %v418 = vunpack.c.l.b16 %v264
    %v419 = vunpack.c.h.b16 %v264
    %v420 = vunpack.c.l.b16 %v265
    %v421 = vunpack.c.h.b16 %v265
    %v422 = vunpack.c.l.b16 %v266
    %v423 = vunpack.c.h.b16 %v266
    %v424 = vunpack.c.l.b16 %v267
    %v425 = vunpack.c.h.b16 %v267
    %v426 = vunpack.c.l.b16 %v268
    %v427 = vunpack.c.h.b16 %v268
    %v428 = vunpack.c.l.b16 %v269
    %v429 = vunpack.c.h.b16 %v269
    %v430 = vunpack.c.l.b16 %v270
    %v431 = vunpack.c.h.b16 %v270
    %v432 = vunpack.c.l.b16 %v271
    %v433 = vunpack.c.h.b16 %v271
    %v434 = vunpack.c.l.b16 %v272
    %v435 = vunpack.c.h.b16 %v272
    %v436 = vunpack.c.l.b16 %v273
    %v437 = vunpack.c.h.b16 %v273
    %v438 = vunpack.c.l.b16 %v274
    %v439 = vunpack.c.h.b16 %v274
    %v440 = vunpack.c.l.b16 %v275
    %v441 = vunpack.c.h.b16 %v275
    %v442 = vunpack.c.l.b16 %v276
    %v443 = vunpack.c.h.b16 %v276
    %v444 = vunpack.c.l.b16 %v277
    %v445 = vunpack.c.h.b16 %v277
    %v446 = vunpack.c.l.b16 %v278
    %v447 = vunpack.c.h.b16 %v278
    %v448 = vunpack.c.l.b16 %v279
    %v449 = vunpack.c.h.b16 %v279
    %v450 = vunpack.c.l.b16 %v280
    %v451 = vunpack.c.h.b16 %v280
    %v452 = vunpack.c.l.b16 %v281
    %v453 = vunpack.c.h.b16 %v281
    %v454 = vunpack.c.l.b16 %v282
    %v455 = vunpack.c.h.b16 %v282
    %v456 = vunpack.c.l.b16 %v283
    %v457 = vunpack.c.h.b16 %v283
    %v458 = vunpack.c.l.b16 %v284
    %v459 = vunpack.c.h.b16 %v284
    %v460 = vunpack.c.l.b16 %v285
    %v461 = vunpack.c.h.b16 %v285
    %v462 = vunpack.c.l.b16 %v286
    %v463 = vunpack.c.h.b16 %v286
    %v464 = vunpack.c.l.b16 %v287
    %v465 = vunpack.c.h.b16 %v287
    %v466 = vunpack.c.l.b16 %v288
    %v467 = vunpack.c.h.b16 %v288
    %v468 = vunpack.c.l.b16 %v289
    %v469 = vunpack.c.h.b16 %v289
    %v470 = vunpack.c.l.b16 %v290
    %v471 = vunpack.c.h.b16 %v290
    %v472 = vunpack.c.l.b16 %v291
    %v473 = vunpack.c.h.b16 %v291
    %v474 = vunpack.c.l.b16 %v292
    %v475 = vunpack.c.h.b16 %v292
    %v476 = vunpack.c.l.b16 %v293
    %v477 = vunpack.c.h.b16 %v293
    %v478 = vunpack.c.l.b16 %v294
    %v479 = vunpack.c.h.b16 %v294
    %v480 = vunpack.c.l.b16 %v295
    %v481 = vunpack.c.h.b16 %v295
    %v482 = vunpack.c.l.b16 %v296
    %v483 = vunpack.c.h.b16 %v296
    %v484 = vunpack.c.l.b16 %v297
    %v485 = vunpack.c.h.b16 %v297
    %v486 = vunpack.c.l.b16 %v298
    %v487 = vunpack.c.h.b16 %v298
    %v488 = vunpack.c.l.b16 %v299
    %v489 = vunpack.c.h.b16 %v299
    %v490 = vunpack.c.l.b16 %v300
    %v491 = vunpack.c.h.b16 %v300
    %v492 = vunpack.c.l.b16 %v301
    %v493 = vunpack.c.h.b16 %v301
    %v494 = vunpack.c.l.b16 %v302
    %v495 = vunpack.c.h.b16 %v302
    %v496 = vunpack.c.l.b16 %v303
    %v497 = vunpack.c.h.b16 %v303
    %v498 = vunpack.c.l.b16 %v304
    %v499 = vunpack.c.h.b16 %v304
    %v500 = vunpack.c.l.b16 %v305
    %v501 = vunpack.c.h.b16 %v305
    %v502 = vunpack.c.l.b16 %v306
    %v503 = vunpack.c.h.b16 %v306
    %v504 = vunpack.c.l.b16 %v307
    %v505 = vunpack.c.h.b16 %v307
    %v506 = vunpack.c.l.b16 %v308
    %v507 = vunpack.c.h.b16 %v308
    %v508 = vunpack.c.l.b16 %v309
    %v509 = vunpack.c.h.b16 %v309
    %v510 = vunpack.c.l.b16 %v310
    %v511 = vunpack.c.h.b16 %v310
    %v512 = vunpack.c.l.b16 %v311
    %v513 = vunpack.c.h.b16 %v311
    %v514 = vunpack.c.l.b16 %v312
    %v515 = vunpack.c.h.b16 %v312
    %v516 = vunpack.c.l.b16 %v313
    %v517 = vunpack.c.h.b16 %v313
    %v518 = vpack.c.b16 %v392, %v390
    %v519 = vpack.c.b16 %v393, %v391
    %v520 = vpack.c.b16 %v396, %v394
    %v521 = vpack.c.b16 %v397, %v395
    %v522 = vpack.c.b16 %v400, %v398
    %v523 = vpack.c.b16 %v401, %v399
    %v524 = vpack.c.b16 %v404, %v402
    %v525 = vpack.c.b16 %v405, %v403
    %v526 = vpack.c.b16 %v408, %v406
    %v527 = vpack.c.b16 %v409, %v407
    %v528 = vpack.c.b16 %v412, %v410
    %v529 = vpack.c.b16 %v413, %v411
    %v530 = vpack.c.b16 %v416, %v414
    %v531 = vpack.c.b16 %v417, %v415
    %v532 = vpack.c.b16 %v420, %v418
    %v533 = vpack.c.b16 %v421, %v419
    %v534 = vpack.c.b16 %v424, %v422
    %v535 = vpack.c.b16 %v425, %v423
    %v536 = vpack.c.b16 %v428, %v426
    %v537 = vpack.c.b16 %v429, %v427
    %v538 = vpack.c.b16 %v432, %v430
    %v539 = vpack.c.b16 %v433, %v431
    %v540 = vpack.c.b16 %v436, %v434
    %v541 = vpack.c.b16 %v437, %v435
    %v542 = vpack.c.b16 %v440, %v438
    %v543 = vpack.c.b16 %v441, %v439
    %v544 = vpack.c.b16 %v444, %v442
    %v545 = vpack.c.b16 %v445, %v443
    %v546 = vpack.c.b16 %v448, %v446
    %v547 = vpack.c.b16 %v449, %v447
    %v548 = vpack.c.b16 %v452, %v450
    %v549 = vpack.c.b16 %v453, %v451
    %v550 = vpack.c.b16 %v456, %v454
    %v551 = vpack.c.b16 %v457, %v455
    %v552 = vpack.c.b16 %v460, %v458
    %v553 = vpack.c.b16 %v461, %v459
    %v554 = vpack.c.b16 %v464, %v462
    %v555 = vpack.c.b16 %v465, %v463
    %v556 = vpack.c.b16 %v468, %v466
    %v557 = vpack.c.b16 %v469, %v467
    %v558 = vpack.c.b16 %v472, %v470
    %v559 = vpack.c.b16 %v473, %v471
    %v560 = vpack.c.b16 %v476, %v474
    %v561 = vpack.c.b16 %v477, %v475
    %v562 = vpack.c.b16 %v480, %v478
    %v563 = vpack.c.b16 %v481, %v479
    %v564 = vpack.c.b16 %v484, %v482
    %v565 = vpack.c.b16 %v485, %v483
    %v566 = vpack.c.b16 %v488, %v486
    %v567 = vpack.c.b16 %v489, %v487
    %v568 = vpack.c.b16 %v492, %v490
    %v569 = vpack.c.b16 %v493, %v491
    %v570 = vpack.c.b16 %v496, %v494
    %v571 = vpack.c.b16 %v497, %v495
    %v572 = vpack.c.b16 %v500, %v498
    %v573 = vpack.c.b16 %v501, %v499
    %v574 = vpack.c.b16 %v504, %v502
    %v575 = vpack.c.b16 %v505, %v503
    %v576 = vpack.c.b16 %v508, %v506
    %v577 = vpack.c.b16 %v509, %v507
    %v578 = vpack.c.b16 %v512, %v510
    %v579 = vpack.c.b16 %v513, %v511
    %v580 = vpack.c.b16 %v516, %v514
    %v581 = vpack.c.b16 %v517, %v515
    %646 = vmatprep.subr.bf16.mxu0 %v533
    %647 = vmatpush1.bf16.msra.mxu0 %v532
    %648 = vmatprep.subr.bf16.mxu0 %v531
    %649 = vmatpush1.bf16.msra.mxu0 %v530
    %650 = vmatprep.subr.bf16.mxu0 %v529
    %651 = vmatpush1.bf16.msra.mxu0 %v528
    %652 = vmatprep.subr.bf16.mxu0 %v527
    %653 = vmatpush1.bf16.msra.mxu0 %v526
    %654 = vmatprep.subr.bf16.mxu0 %v525
    %655 = vmatpush1.bf16.msra.mxu0 %v524
    %656 = vmatprep.subr.bf16.mxu0 %v523
    %657 = vmatpush1.bf16.msra.mxu0 %v522
    %658 = vmatprep.subr.bf16.mxu0 %v521
    %659 = vmatpush1.bf16.msra.mxu0 %v520
    %660 = vmatprep.subr.bf16.mxu0 %v519
    %661 = vmatpush1.bf16.msra.mxu0 %v518
    %662 = vmatprep.subr.bf16.mxu0 %v549
    %663 = vmatpush2.bf16.msra.mxu0 %v548
    %664 = vmatprep.subr.bf16.mxu0 %v547
    %665 = vmatpush2.bf16.msra.mxu0 %v546
    %666 = vmatprep.subr.bf16.mxu0 %v545
    %667 = vmatpush2.bf16.msra.mxu0 %v544
    %668 = vmatprep.subr.bf16.mxu0 %v543
    %669 = vmatpush2.bf16.msra.mxu0 %v542
    %670 = vmatprep.subr.bf16.mxu0 %v541
    %671 = vmatpush2.bf16.msra.mxu0 %v540
    %672 = vmatprep.subr.bf16.mxu0 %v539
    %673 = vmatpush2.bf16.msra.mxu0 %v538
    %674 = vmatprep.subr.bf16.mxu0 %v537
    %675 = vmatpush2.bf16.msra.mxu0 %v536
    %676 = vmatprep.subr.bf16.mxu0 %v535
    %677 = vmatpush2.bf16.msra.mxu0 %v534
    %678 = vmatprep.mubr.bf16.mxu0 %v247
    %679 = vmatmul.mubr.bf16.gmra.mxu0 %v246
    %v680 = vpop.f32.mrf.mxu0
    %v681 = vadd.f32 %v319, %v680
    %v682 = vpop.f32.mrf.mxu0
    %v683 = vadd.f32 %v323, %v682
    %v684 = vpop.f32.mrf.mxu0
    %v685 = vadd.f32 %v319, %v684
    %v686 = vpop.f32.mrf.mxu0
    %v687 = vadd.f32 %v323, %v686
    %688 = vdwg.mxu0
    %689 = vmatprep.subr.bf16.mxu0 %v565
    %690 = vmatpush1.bf16.msra.mxu0 %v564
    %691 = vmatprep.subr.bf16.mxu0 %v563
    %692 = vmatpush1.bf16.msra.mxu0 %v562
    %693 = vmatprep.subr.bf16.mxu0 %v561
    %694 = vmatpush1.bf16.msra.mxu0 %v560
    %695 = vmatprep.subr.bf16.mxu0 %v559
    %696 = vmatpush1.bf16.msra.mxu0 %v558
    %697 = vmatprep.subr.bf16.mxu0 %v557
    %698 = vmatpush1.bf16.msra.mxu0 %v556
    %699 = vmatprep.subr.bf16.mxu0 %v555
    %700 = vmatpush1.bf16.msra.mxu0 %v554
    %701 = vmatprep.subr.bf16.mxu0 %v553
    %702 = vmatpush1.bf16.msra.mxu0 %v552
    %703 = vmatprep.subr.bf16.mxu0 %v551
    %704 = vmatpush1.bf16.msra.mxu0 %v550
    %705 = vmatprep.subr.bf16.mxu0 %v581
    %706 = vmatpush2.bf16.msra.mxu0 %v580
    %707 = vmatprep.subr.bf16.mxu0 %v579
    %708 = vmatpush2.bf16.msra.mxu0 %v578
    %709 = vmatprep.subr.bf16.mxu0 %v577
    %710 = vmatpush2.bf16.msra.mxu0 %v576
    %711 = vmatprep.subr.bf16.mxu0 %v575
    %712 = vmatpush2.bf16.msra.mxu0 %v574
    %713 = vmatprep.subr.bf16.mxu0 %v573
    %714 = vmatpush2.bf16.msra.mxu0 %v572
    %715 = vmatprep.subr.bf16.mxu0 %v571
    %716 = vmatpush2.bf16.msra.mxu0 %v570
    %717 = vmatprep.subr.bf16.mxu0 %v569
    %718 = vmatpush2.bf16.msra.mxu0 %v568
    %719 = vmatprep.subr.bf16.mxu0 %v567
    %720 = vmatpush2.bf16.msra.mxu0 %v566
    %721 = vmatprep.mubr.bf16.mxu0 %v249
    %722 = vmatmul.mubr.bf16.gmra.mxu0 %v248
    %v723 = vpop.f32.mrf.mxu0
    %v724 = vadd.f32 %v681, %v723
    %v725 = vpop.f32.mrf.mxu0
    %v726 = vadd.f32 %v683, %v725
    %v727 = vpop.f32.mrf.mxu0
    %v728 = vadd.f32 %v685, %v727
    %v729 = vpop.f32.mrf.mxu0
    %v730 = vadd.f32 %v687, %v729
    %731 = vdwg.mxu0
    %v732 = vmax.f32 %v724, 0.0
    %v733 = vmax.f32 %v726, 0.0
    %v734 = vmax.f32 %v728, 0.0
    %v735 = vmax.f32 %v730, 0.0
    %v736 = vpack.c.bf16 %v734, %v732
    %v737 = vpack.c.bf16 %v735, %v733
    %v738 = vld [vmem:[#allocation7] sm:$0xf]
    %v739 = vld [vmem:[#allocation7 + $0x4] sm:$0xf]
    %v740 = vld [vmem:[#allocation7 + $0x8] sm:$0xf]
    %v741 = vld [vmem:[#allocation7 + $0xc] sm:$0xf]
    %v742 = vld [vmem:[#allocation7 + $0x10] sm:$0xf]
    %v743 = vld [vmem:[#allocation7 + $0x14] sm:$0xf]
    %v744 = vld [vmem:[#allocation7 + $0x18] sm:$0xf]
    %v745 = vld [vmem:[#allocation7 + $0x1c] sm:$0xf]
    %v746 = vld [vmem:[#allocation7 + $0x20] sm:$0xf]
    %v747 = vld [vmem:[#allocation7 + $0x24] sm:$0xf]
    %v748 = vld [vmem:[#allocation7 + $0x28] sm:$0xf]
    %v749 = vld [vmem:[#allocation7 + $0x2c] sm:$0xf]
    %v750 = vld [vmem:[#allocation7 + $0x30] sm:$0xf]
    %v751 = vld [vmem:[#allocation7 + $0x34] sm:$0xf]
    %v752 = vld [vmem:[#allocation7 + $0x38] sm:$0xf]
    %v753 = vld [vmem:[#allocation7 + $0x3c] sm:$0xf]
    %v754 = vld [vmem:[#allocation7 + $0x40] sm:$0xf]
    %v755 = vld [vmem:[#allocation7 + $0x44] sm:$0xf]
    %v756 = vld [vmem:[#allocation7 + $0x48] sm:$0xf]
    %v757 = vld [vmem:[#allocation7 + $0x4c] sm:$0xf]
    %v758 = vld [vmem:[#allocation7 + $0x50] sm:$0xf]
    %v759 = vld [vmem:[#allocation7 + $0x54] sm:$0xf]
    %v760 = vld [vmem:[#allocation7 + $0x58] sm:$0xf]
    %v761 = vld [vmem:[#allocation7 + $0x5c] sm:$0xf]
    %v762 = vld [vmem:[#allocation7 + $0x60] sm:$0xf]
    %v763 = vld [vmem:[#allocation7 + $0x64] sm:$0xf]
    %v764 = vld [vmem:[#allocation7 + $0x68] sm:$0xf]
    %v765 = vld [vmem:[#allocation7 + $0x6c] sm:$0xf]
    %v766 = vld [vmem:[#allocation7 + $0x70] sm:$0xf]
    %v767 = vld [vmem:[#allocation7 + $0x74] sm:$0xf]
    %v768 = vld [vmem:[#allocation7 + $0x78] sm:$0xf]
    %v769 = vld [vmem:[#allocation7 + $0x7c] sm:$0xf]
    %v770 = vld [vmem:[%s6] sm:$0x1]
    %v772 = vlaneseq
    %v773 = vshrl.u32 %v772, 7
    %v774 = vsub.s32 0, %v773
    %v775 = vrot.slane %v770, %v774
    %v809 = vunpack.c.l.b16 %v738
    %v810 = vunpack.c.l.b16 %v739
    %v811 = vunpack.c.l.b16 %v740
    %v812 = vunpack.c.l.b16 %v741
    %v813 = vunpack.c.l.b16 %v742
    %v814 = vunpack.c.l.b16 %v743
    %v815 = vunpack.c.l.b16 %v744
    %v816 = vunpack.c.l.b16 %v745
    %v817 = vunpack.c.l.b16 %v746
    %v818 = vunpack.c.l.b16 %v747
    %v819 = vunpack.c.l.b16 %v748
    %v820 = vunpack.c.l.b16 %v749
    %v821 = vunpack.c.l.b16 %v750
    %v822 = vunpack.c.l.b16 %v751
    %v823 = vunpack.c.l.b16 %v752
    %v824 = vunpack.c.l.b16 %v753
    %v825 = vunpack.c.l.b16 %v754
    %v826 = vunpack.c.l.b16 %v755
    %v827 = vunpack.c.l.b16 %v756
    %v828 = vunpack.c.l.b16 %v757
    %v829 = vunpack.c.l.b16 %v758
    %v830 = vunpack.c.l.b16 %v759
    %v831 = vunpack.c.l.b16 %v760
    %v832 = vunpack.c.l.b16 %v761
    %v833 = vunpack.c.l.b16 %v762
    %v834 = vunpack.c.l.b16 %v763
    %v835 = vunpack.c.l.b16 %v764
    %v836 = vunpack.c.l.b16 %v765
    %v837 = vunpack.c.l.b16 %v766
    %v838 = vunpack.c.l.b16 %v767
    %v839 = vunpack.c.l.b16 %v768
    %v840 = vunpack.c.l.b16 %v769
    %v841 = vpack.c.b16 %v810, %v809
    %v842 = vpack.c.b16 %v812, %v811
    %v843 = vpack.c.b16 %v814, %v813
    %v844 = vpack.c.b16 %v816, %v815
    %v845 = vpack.c.b16 %v818, %v817
    %v846 = vpack.c.b16 %v820, %v819
    %v847 = vpack.c.b16 %v822, %v821
    %v848 = vpack.c.b16 %v824, %v823
    %v849 = vpack.c.b16 %v826, %v825
    %v850 = vpack.c.b16 %v828, %v827
    %v851 = vpack.c.b16 %v830, %v829
    %v852 = vpack.c.b16 %v832, %v831
    %v853 = vpack.c.b16 %v834, %v833
    %v854 = vpack.c.b16 %v836, %v835
    %v855 = vpack.c.b16 %v838, %v837
    %v856 = vpack.c.b16 %v840, %v839
    %873 = vmatprep.subr.bf16.mxu0 0
    %874 = vmatpush1.bf16.msra.mxu0 %v848
    %875 = vmatprep.subr.bf16.mxu0 0
    %876 = vmatpush1.bf16.msra.mxu0 %v847
    %877 = vmatprep.subr.bf16.mxu0 0
    %878 = vmatpush1.bf16.msra.mxu0 %v846
    %879 = vmatprep.subr.bf16.mxu0 0
    %880 = vmatpush1.bf16.msra.mxu0 %v845
    %881 = vmatprep.subr.bf16.mxu0 0
    %882 = vmatpush1.bf16.msra.mxu0 %v844
    %883 = vmatprep.subr.bf16.mxu0 0
    %884 = vmatpush1.bf16.msra.mxu0 %v843
    %885 = vmatprep.subr.bf16.mxu0 0
    %886 = vmatpush1.bf16.msra.mxu0 %v842
    %887 = vmatprep.subr.bf16.mxu0 0
    %888 = vmatpush1.bf16.msra.mxu0 %v841
    %889 = vmatprep.subr.bf16.mxu0 0
    %890 = vmatpush2.bf16.msra.mxu0 %v856
    %891 = vmatprep.subr.bf16.mxu0 0
    %892 = vmatpush2.bf16.msra.mxu0 %v855
    %893 = vmatprep.subr.bf16.mxu0 0
    %894 = vmatpush2.bf16.msra.mxu0 %v854
    %895 = vmatprep.subr.bf16.mxu0 0
    %896 = vmatpush2.bf16.msra.mxu0 %v853
    %897 = vmatprep.subr.bf16.mxu0 0
    %898 = vmatpush2.bf16.msra.mxu0 %v852
    %899 = vmatprep.subr.bf16.mxu0 0
    %900 = vmatpush2.bf16.msra.mxu0 %v851
    %901 = vmatprep.subr.bf16.mxu0 0
    %902 = vmatpush2.bf16.msra.mxu0 %v850
    %903 = vmatprep.subr.bf16.mxu0 0
    %904 = vmatpush2.bf16.msra.mxu0 %v849
    %905 = vmatprep.mubr.bf16.mxu0 %v737
    %906 = vmatmul.mubr.bf16.gmra.mxu0 %v736
    %v907 = vpop.f32.mrf.mxu0
    %v908 = vadd.f32 %v775, %v907
    %v909 = vpop.f32.mrf.mxu0
    %v910 = vpop.f32.mrf.mxu0
    %v911 = vadd.f32 %v775, %v910
    %v912 = vpop.f32.mrf.mxu0
    %913 = vdwg.mxu0
    %v914 = vmax.f32 %v908, 0.0
    %v915 = vmax.f32 %v911, 0.0
    %v916 = vpack.c.bf16 %v915, %v914
    %v917 = vld [vmem:[%s7] sm:$0xf]
    %v918 = vld [vmem:[%s7 + $0x4] sm:$0xf]
    %v919 = vld [vmem:[%s7 + $0x8] sm:$0xf]
    %v920 = vld [vmem:[%s7 + $0xc] sm:$0xf]
    %v921 = vld [vmem:[%s7 + $0x10] sm:$0xf]
    %v922 = vld [vmem:[%s7 + $0x14] sm:$0xf]
    %v923 = vld [vmem:[%s7 + $0x18] sm:$0xf]
    %v924 = vld [vmem:[%s7 + $0x1c] sm:$0xf]
    %v925 = vld [vmem:[%s7 + $0x20] sm:$0xf]
    %v926 = vld [vmem:[%s7 + $0x24] sm:$0xf]
    %v927 = vld [vmem:[%s7 + $0x28] sm:$0xf]
    %v928 = vld [vmem:[%s7 + $0x2c] sm:$0xf]
    %v929 = vld [vmem:[%s7 + $0x30] sm:$0xf]
    %v930 = vld [vmem:[%s7 + $0x34] sm:$0xf]
    %v931 = vld [vmem:[%s7 + $0x38] sm:$0xf]
    %v932 = vld [vmem:[%s7 + $0x3c] sm:$0xf]
    %v933 = vld [vmem:[%s8] sm:$0x1]
    %v935 = vlaneseq
    %v936 = vshrl.u32 %v935, 7
    %v937 = vsub.s32 0, %v936
    %v938 = vrot.slane %v933, %v937
    %v956 = vunpack.c.l.b16 %v917
    %v957 = vunpack.c.l.b16 %v918
    %v958 = vunpack.c.l.b16 %v919
    %v959 = vunpack.c.l.b16 %v920
    %v960 = vunpack.c.l.b16 %v921
    %v961 = vunpack.c.l.b16 %v922
    %v962 = vunpack.c.l.b16 %v923
    %v963 = vunpack.c.l.b16 %v924
    %v964 = vunpack.c.l.b16 %v925
    %v965 = vunpack.c.l.b16 %v926
    %v966 = vunpack.c.l.b16 %v927
    %v967 = vunpack.c.l.b16 %v928
    %v968 = vunpack.c.l.b16 %v929
    %v969 = vunpack.c.l.b16 %v930
    %v970 = vunpack.c.l.b16 %v931
    %v971 = vunpack.c.l.b16 %v932
    %v972 = vpack.c.b16 %v957, %v956
    %v973 = vpack.c.b16 %v959, %v958
    %v974 = vpack.c.b16 %v961, %v960
    %v975 = vpack.c.b16 %v963, %v962
    %v976 = vpack.c.b16 %v965, %v964
    %v977 = vpack.c.b16 %v967, %v966
    %v978 = vpack.c.b16 %v969, %v968
    %v979 = vpack.c.b16 %v971, %v970
    %988 = vmatprep.subr.bf16.mxu0 0
    %989 = vmatpush1.bf16.msra.mxu0 %v979
    %990 = vmatprep.subr.bf16.mxu0 0
    %991 = vmatpush1.bf16.msra.mxu0 %v978
    %992 = vmatprep.subr.bf16.mxu0 0
    %993 = vmatpush1.bf16.msra.mxu0 %v977
    %994 = vmatprep.subr.bf16.mxu0 0
    %995 = vmatpush1.bf16.msra.mxu0 %v976
    %996 = vmatprep.subr.bf16.mxu0 0
    %997 = vmatpush1.bf16.msra.mxu0 %v975
    %998 = vmatprep.subr.bf16.mxu0 0
    %999 = vmatpush1.bf16.msra.mxu0 %v974
    %1000 = vmatprep.subr.bf16.mxu0 0
    %1001 = vmatpush1.bf16.msra.mxu0 %v973
    %1002 = vmatprep.subr.bf16.mxu0 0
    %1003 = vmatpush1.bf16.msra.mxu0 %v972
    %1004 = vmatprep.subr.bf16.mxu0 0
    %1005 = vmatpush2.bf16.msra.mxu0 0
    %1006 = vmatprep.subr.bf16.mxu0 0
    %1007 = vmatpush2.bf16.msra.mxu0 0
    %1008 = vmatprep.subr.bf16.mxu0 0
    %1009 = vmatpush2.bf16.msra.mxu0 0
    %1010 = vmatprep.subr.bf16.mxu0 0
    %1011 = vmatpush2.bf16.msra.mxu0 0
    %1012 = vmatprep.subr.bf16.mxu0 0
    %1013 = vmatpush2.bf16.msra.mxu0 0
    %1014 = vmatprep.subr.bf16.mxu0 0
    %1015 = vmatpush2.bf16.msra.mxu0 0
    %1016 = vmatprep.subr.bf16.mxu0 0
    %1017 = vmatpush2.bf16.msra.mxu0 0
    %1018 = vmatprep.subr.bf16.mxu0 0
    %1019 = vmatpush2.bf16.msra.mxu0 0
    %1020 = vmatprep.mubr.bf16.mxu0 0
    %1021 = vmatmul.mubr.bf16.gmra.mxu0 %v916
    %v1022 = vpop.f32.mrf.mxu0
    %v1023 = vadd.f32 %v938, %v1022
    %v1024 = vpop.f32.mrf.mxu0
    %v1025 = vpop.f32.mrf.mxu0
    %v1026 = vadd.f32 %v938, %v1025
    %v1027 = vpop.f32.mrf.mxu0
    %1028 = vdwg.mxu0
    %v1029 = vtanh.pop %v1023
    %v1030 = vtanh.pop %v1026
    %vm1031 = vcmask 64512
    %1032 = vst.msk [vmem:[#allocation8] sm:$0xff] %vm1031, %v1029
    %1033 = vst.msk [vmem:[#allocation8 + $0x8] sm:$0xff] %vm1031, %v1030
    // Predicated region
    $region50: #{actor_forward.1} parent=1 // pred_check
      _
    $region51: #{actor_forward.1} parent=1 // pred_check_branch
      %1035 = sbr.rel (0) target = $region53
    $region52: #{actor_forward.1} parent=1 // pred_region
      %s1037 = ssub.s32 256, 128
      %1038 = vsyncadd [#allocation4], %s1037
      %s1039 = sshll.u32 [#allocation8], 4
      %s1040 = int_to_ptr.vmem [resolvable:$true] %s1039
      %1045 = dma.vmem_to_hbm [thread:$0]  %s1040, 128, %s9, [#allocation4], 128, 128, 8
    $region53: #{actor_forward.1} parent=1 // pred_fallthru
      _
    // Predicated region
    $region54: #{actor_forward.1} parent=1 // pred_check
      _
    $region55: #{actor_forward.1} parent=1 // pred_check_branch
      %1047 = sbr.rel (0) target = $region57
    $region56: #{actor_forward.1} parent=1 // pred_region
      %1048 = dma.done [#allocation4], 256
    $region57: #{actor_forward.1} parent=1 // pred_fallthru
      _
    %1049 = vsyncpa [#allocation3], 1
    %1050 = vsyncpa [#allocation6], 1
    %1051 = vsyncpa [#allocation4], 1

</llo_original>
